<compile_context>
chip_gen: v6e
topology: v6e:2x2x1
jax: 0.10.0
libtpu: 0.0.40
codegen_flags: <defaults>
</compile_context>

<pallas_src>
import jax
import jax.numpy as jnp
from jax.experimental import pallas as pl
from jax.experimental.pallas import tpu as pltpu

_LANES = 128
_MAX_BLOCK_ROWS = 1024   # (1024, 128) f32 block = 512 KiB per input per buffer


def _make_sums_kernel(num_preds, has_instance, rows, rows_blk, blocks_per_core):
    """Builds the fused masked squared-error reduction kernel."""
    num_inputs = num_preds + 2 + (2 if has_instance else 0)
    num_outputs = num_preds + 2   # per-pred SSE sums, mask count, positive count

    def kernel(*refs):
        in_refs = refs[:num_inputs]
        out_refs = refs[num_inputs:num_inputs + num_outputs]
        acc_refs = refs[num_inputs + num_outputs:]

        pred_refs = in_refs[:num_preds]
        tgt_ref = in_refs[num_preds]
        vm_ref = in_refs[num_preds + 1]

        i = pl.program_id(1)

        @pl.when(i == 0)
        def _init():
            for acc in acc_refs:
                acc[...] = jnp.zeros_like(acc)

        # Logical (unclamped) block position -> row mask for blocks that
        # over-cover the array; out-of-range rows hold unspecified data and
        # must contribute exactly zero.
        row0 = (pl.program_id(0) * blocks_per_core + i) * rows_blk
        row_ids = row0 + jax.lax.broadcasted_iota(
            jnp.int32, (rows_blk, _LANES), 0)
        in_rows = row_ids < rows

        tgt = tgt_ref[...].astype(jnp.float32)
        vm = vm_ref[...].astype(jnp.float32)

        pos = in_rows & (tgt > 0.0)       # targets > 0 (padded tail has tgt == 0)
        valid = pos & (vm > 0.0)
        if has_instance:
            inst = in_refs[num_preds + 2][...].astype(jnp.float32)
            w = in_refs[num_preds + 3][...].astype(jnp.float32)
            valid = valid & (inst > 0.0)

        # jnp.where (select) also kills any NaN/Inf garbage from out-of-range rows.
        acc_refs[num_preds][...] += jnp.where(valid, 1.0, 0.0)        # mask count
        acc_refs[num_preds + 1][...] += jnp.where(pos, 1.0, 0.0)      # (targets>0) count
        for p in range(num_preds):
            d = pred_refs[p][...].astype(jnp.float32) - tgt
            sq = d * d
            if has_instance:
                sq = sq * w
            acc_refs[p][...] += jnp.where(valid, sq, 0.0)

        # Single cross-sublane reduction per core, into lane-dense outputs.
        @pl.when(i == blocks_per_core - 1)
        def _finalize():
            for p in range(num_outputs):
                out_refs[p][...] = jnp.sum(
                    acc_refs[p][...], axis=0).reshape(1, 1, _LANES)

    return kernel


@jax.jit
def _masked_sqerr_sums(preds, targets, valid_mask, instance_mask=None,
                       weight=None):
    """Fused masked squared-error reductions over flattened rays.

    Returns (sums, count, pos_count) where
      sums[p]   = sum(mask * w * (preds[p] - targets)**2)
      count     = sum(mask), mask = (valid_mask>0) & (targets>0) [& (instance_mask>0)]
      pos_count = sum(targets > 0)
    """
    num_preds = len(preds)
    has_instance = instance_mask is not None
    n = targets.size
    rows = pl.cdiv(n, _LANES)
    padded_n = rows * _LANES

    def prep(x):
        x = x.reshape(-1)
        if x.dtype == jnp.bool_:
            x = x.astype(jnp.float32)
        if padded_n != n:             # only when N % 128 != 0 (< 128 zeros)
            x = jnp.pad(x, (0, padded_n - n))
        return x.reshape(rows, _LANES)

    ins = [prep(p) for p in preds] + [prep(targets), prep(valid_mask)]
    if has_instance:
        ins += [prep(instance_mask), prep(weight)]

    rows_blk = rows if rows <= _MAX_BLOCK_ROWS else _MAX_BLOCK_ROWS
    blocks_total = pl.cdiv(rows, rows_blk)
    num_cores = 2 if blocks_total >= 2 else 1     # megacore split on v7x
    blocks_per_core = pl.cdiv(blocks_total, num_cores)
    num_outputs = num_preds + 2

    def in_index(c, i):
        # Clamp so the DMA window start stays inside the array; the kernel's
        # row mask (from the *unclamped* position) zeroes any duplicated block.
        return (jnp.minimum(c * blocks_per_core + i, blocks_total - 1), 0)

    kernel = _make_sums_kernel(num_preds, has_instance, rows, rows_blk,
                               blocks_per_core)

    outs = pl.pallas_call(
        kernel,
        out_shape=tuple(
            jax.ShapeDtypeStruct((num_cores, 1, _LANES), jnp.float32)
            for _ in range(num_outputs)),
        grid=(num_cores, blocks_per_core),
        in_specs=[pl.BlockSpec((rows_blk, _LANES), in_index)] * len(ins),
        out_specs=tuple(
            pl.BlockSpec((1, 1, _LANES), lambda c, i: (c, 0, 0))
            for _ in range(num_outputs)),
        scratch_shapes=[pltpu.VMEM((rows_blk, _LANES), jnp.float32)
                        for _ in range(num_outputs)],
        compiler_params=pltpu.CompilerParams(
            dimension_semantics=("parallel", "arbitrary")),
    )(*ins)

    sums = tuple(jnp.sum(o) for o in outs[:num_preds])
    count = jnp.sum(outs[num_preds])
    pos_count = jnp.sum(outs[num_preds + 1])
    return sums, count, pos_count


def depth_loss(inputs, batch, coef=1.0, instance_only=False):
    """JAX/Pallas port of DepthLoss.forward.

    Mirrors the PyTorch module, including returning None when there are no
    positive-depth targets / instance-masked rays.  Those early exits need
    concrete (non-jit) inputs; the single host sync reads counts that the
    fused kernel already produced (no extra full pass over the data).
    """
    targets = batch['depths'].reshape(-1)
    valid_mask = batch['valid_mask'].reshape(-1)

    if instance_only:
        instance_mask = batch['instance_mask'].reshape(-1)
        weight = batch['instance_mask_weight'].reshape(-1)
        preds = []
        if 'depth_instance_coarse' in inputs:
            preds.append(inputs['depth_instance_coarse'].reshape(-1))
        if 'depth_instance_fine' in inputs:
            # opacity_instance_fine is gathered but unused in the reference module.
            preds.append(inputs['depth_instance_fine'].reshape(-1))

        if not preds:
            # Degenerate config: the module would return coef * 0 after the checks.
            if float(jnp.sum(targets > 0)) == 0.0:
                return None
            mask = (valid_mask > 0) & (targets > 0) & (instance_mask > 0)
            if float(jnp.sum(mask)) == 0.0:
                return None
            return coef * jnp.float32(0.0)

        sums, count, pos_count = _masked_sqerr_sums(
            preds, targets, valid_mask, instance_mask, weight)
        if float(pos_count) == 0.0:
            return None
        if float(count) == 0.0:
            return None
        loss = sum(s / count for s in sums)
    else:
        preds = [inputs['depth_coarse'].reshape(-1)]
        if 'rgb_instance_fine' in inputs:   # same quirky gate as the module
            preds.append(inputs['depth_fine'].reshape(-1))
        sums, count, pos_count = _masked_sqerr_sums(preds, targets, valid_mask)
        if float(pos_count) == 0.0:
            return None
        # NOTE: like the PyTorch module, count == 0 here yields NaN (mean over
        # an empty selection) on purpose — it is not guarded.
        loss = sum(s / count for s in sums)

    return coef * loss


if __name__ == "__main__":
    key = jax.random.PRNGKey(0)
    ks = jax.random.split(key, 12)

    # Small ray batch consistent with the module: 2 images x 256 rays.
    B, R = 2, 256
    N = B * R

    depths = jax.random.uniform(ks[0], (B, R), jnp.float32, -0.3, 4.0)
    valid_mask = (jax.random.uniform(ks[1], (B, R)) > 0.2).astype(jnp.float32)
    batch = {'depths': depths, 'valid_mask': valid_mask}
    inputs = {
        'depth_coarse': jax.random.uniform(ks[2], (N,), jnp.float32, 0.0, 4.0),
        'depth_fine': jax.random.uniform(ks[3], (N,), jnp.float32, 0.0, 4.0),
        # presence of this key enables the fine-depth term, as in the module
        'rgb_instance_fine': jax.random.uniform(ks[4], (N, 3), jnp.float32),
    }

    loss = jax.block_until_ready(depth_loss(inputs, batch, coef=1.0))

    t = depths.reshape(-1)
    m = ((valid_mask.reshape(-1) > 0) & (t > 0)).astype(jnp.float32)
    ref = (jnp.sum(m * (inputs['depth_coarse'] - t) ** 2) / jnp.sum(m)
           + jnp.sum(m * (inputs['depth_fine'] - t) ** 2) / jnp.sum(m))
    assert jnp.allclose(loss, ref, rtol=1e-4, atol=1e-6), (loss, ref)

    # instance_only branch (weighted masked MSE).
    inst = (jax.random.uniform(ks[5], (N,)) > 0.5).astype(jnp.float32)
    inst_w = jax.random.uniform(ks[6], (N,), jnp.float32, 0.5, 2.0)
    batch_i = dict(batch, instance_mask=inst, instance_mask_weight=inst_w)
    inputs_i = {
        'depth_instance_coarse': inputs['depth_coarse'],
        'depth_instance_fine': inputs['depth_fine'],
        'opacity_instance_fine': jax.random.uniform(ks[7], (N,), jnp.float32),
    }
    loss_i = jax.block_until_ready(
        depth_loss(inputs_i, batch_i, coef=0.5, instance_only=True))

    mi = m * (inst > 0).astype(jnp.float32)
    ref_i = 0.5 * (
        jnp.sum(mi * inst_w * (inputs['depth_coarse'] - t) ** 2) / jnp.sum(mi)
        + jnp.sum(mi * inst_w * (inputs['depth_fine'] - t) ** 2) / jnp.sum(mi))
    assert jnp.allclose(loss_i, ref_i, rtol=1e-4, atol=1e-6), (loss_i, ref_i)

    # Larger ragged N: exercises the multi-block grid, the 2-core split and the
    # in-kernel tail masking (no host-side padding to the block size).
    N2 = 2 * _MAX_BLOCK_ROWS * _LANES + 37
    d2 = jax.random.uniform(ks[8], (N2,), jnp.float32, -0.5, 5.0)
    v2 = (jax.random.uniform(ks[9], (N2,)) > 0.3).astype(jnp.float32)
    c2 = jax.random.uniform(ks[10], (N2,), jnp.float32, 0.0, 5.0)
    loss2 = jax.block_until_ready(
        depth_loss({'depth_coarse': c2}, {'depths': d2, 'valid_mask': v2}))
    m2 = ((v2 > 0) & (d2 > 0)).astype(jnp.float32)
    ref2 = jnp.sum(m2 * (c2 - d2) ** 2) / jnp.sum(m2)
    assert jnp.allclose(loss2, ref2, rtol=1e-4, atol=1e-6), (loss2, ref2)

    print("KERNEL_OK")
</pallas_src>

<mosaic_0001>
module attributes {stable_mosaic.version = 11 : i64} {
  func.func @kernel(%arg0: i32, %arg1: i32, %arg2: memref<4x128xf32, #tpu.memory_space<vmem>>, %arg3: memref<4x128xf32, #tpu.memory_space<vmem>>, %arg4: memref<4x128xf32, #tpu.memory_space<vmem>>, %arg5: memref<4x128xf32, #tpu.memory_space<vmem>>, %arg6: memref<1x1x128xf32, #tpu.memory_space<vmem>>, %arg7: memref<1x1x128xf32, #tpu.memory_space<vmem>>, %arg8: memref<1x1x128xf32, #tpu.memory_space<vmem>>, %arg9: memref<1x1x128xf32, #tpu.memory_space<vmem>>, %arg10: memref<4x128xf32, #tpu.memory_space<vmem>>, %arg11: memref<4x128xf32, #tpu.memory_space<vmem>>, %arg12: memref<4x128xf32, #tpu.memory_space<vmem>>, %arg13: memref<4x128xf32, #tpu.memory_space<vmem>>) attributes {dimension_semantics = [#tpu.dimension_semantics<parallel>, #tpu.dimension_semantics<arbitrary>], iteration_bounds = array<i64: 1, 1>, scalar_prefetch = 0 : i64, scratch_operands = 4 : i64, tpu.core_type = #tpu.core_type<tc>, window_params = [{transform_indices = @transform_0, window_bounds = array<i64: 4, 128>}, {transform_indices = @transform_1, window_bounds = array<i64: 4, 128>}, {transform_indices = @transform_2, window_bounds = array<i64: 4, 128>}, {transform_indices = @transform_3, window_bounds = array<i64: 4, 128>}, {transform_indices = @transform_4, window_bounds = array<i64: 1, 1, 128>}, {transform_indices = @transform_5, window_bounds = array<i64: 1, 1, 128>}, {transform_indices = @transform_6, window_bounds = array<i64: 1, 1, 128>}, {transform_indices = @transform_7, window_bounds = array<i64: 1, 1, 128>}]} {
    %c0_i32 = arith.constant 0 : i32
    %0 = arith.cmpi eq, %arg1, %c0_i32 : i32
    %1 = arith.extui %0 : i1 to i32
    %c0_i32_0 = arith.constant 0 : i32
    %2 = arith.cmpi ne, %1, %c0_i32_0 : i32
    scf.if %2 {
      %cst_34 = arith.constant 0.000000e+00 : f32
      %50 = vector.broadcast %cst_34 : f32 to vector<4x128xf32>
      %c0_35 = arith.constant 0 : index
      %c0_36 = arith.constant 0 : index
      %51 = vector.load %arg10[%c0_35, %c0_36] : memref<4x128xf32, #tpu.memory_space<vmem>>, vector<4x128xf32>
      tpu.vector_store %arg10[%c0_35, %c0_36], %50 {strides = array<i32>} : memref<4x128xf32, #tpu.memory_space<vmem>>, vector<4x128xf32>,
      %cst_37 = arith.constant 0.000000e+00 : f32
      %52 = vector.broadcast %cst_37 : f32 to vector<4x128xf32>
      %c0_38 = arith.constant 0 : index
      %c0_39 = arith.constant 0 : index
      %53 = vector.load %arg11[%c0_38, %c0_39] : memref<4x128xf32, #tpu.memory_space<vmem>>, vector<4x128xf32>
      tpu.vector_store %arg11[%c0_38, %c0_39], %52 {strides = array<i32>} : memref<4x128xf32, #tpu.memory_space<vmem>>, vector<4x128xf32>,
      %cst_40 = arith.constant 0.000000e+00 : f32
      %54 = vector.broadcast %cst_40 : f32 to vector<4x128xf32>
      %c0_41 = arith.constant 0 : index
      %c0_42 = arith.constant 0 : index
      %55 = vector.load %arg12[%c0_41, %c0_42] : memref<4x128xf32, #tpu.memory_space<vmem>>, vector<4x128xf32>
      tpu.vector_store %arg12[%c0_41, %c0_42], %54 {strides = array<i32>} : memref<4x128xf32, #tpu.memory_space<vmem>>, vector<4x128xf32>,
      %cst_43 = arith.constant 0.000000e+00 : f32
      %56 = vector.broadcast %cst_43 : f32 to vector<4x128xf32>
      %c0_44 = arith.constant 0 : index
      %c0_45 = arith.constant 0 : index
      %57 = vector.load %arg13[%c0_44, %c0_45] : memref<4x128xf32, #tpu.memory_space<vmem>>, vector<4x128xf32>
      tpu.vector_store %arg13[%c0_44, %c0_45], %56 {strides = array<i32>} : memref<4x128xf32, #tpu.memory_space<vmem>>, vector<4x128xf32>,
    } else {
    }
    %c1_i32 = arith.constant 1 : i32
    %3 = arith.muli %arg0, %c1_i32 : i32
    %4 = arith.addi %3, %arg1 : i32
    %c4_i32 = arith.constant 4 : i32
    %5 = arith.muli %4, %c4_i32 : i32
    %6 = tpu.iota {dimensions = array<i32: 0>} : vector<4x128xi32>
    %7 = vector.broadcast %5 : i32 to vector<4x128xi32>
    %8 = arith.addi %7, %6 : vector<4x128xi32>
    %c4_i32_1 = arith.constant 4 : i32
    %9 = vector.broadcast %c4_i32_1 : i32 to vector<4x128xi32>
    %10 = arith.cmpi slt, %8, %9 : vector<4x128xi32>
    %c0 = arith.constant 0 : index
    %c0_2 = arith.constant 0 : index
    %11 = vector.load %arg4[%c0, %c0_2] : memref<4x128xf32, #tpu.memory_space<vmem>>, vector<4x128xf32>
    %c0_3 = arith.constant 0 : index
    %c0_4 = arith.constant 0 : index
    %12 = vector.load %arg5[%c0_3, %c0_4] : memref<4x128xf32, #tpu.memory_space<vmem>>, vector<4x128xf32>
    %cst = arith.constant 0.000000e+00 : f32
    %13 = vector.broadcast %cst : f32 to vector<4x128xf32>
    %14 = arith.cmpf ogt, %11, %13 : vector<4x128xf32>
    %15 = arith.andi %10, %14 : vector<4x128xi1>
    %cst_5 = arith.constant 0.000000e+00 : f32
    %16 = vector.broadcast %cst_5 : f32 to vector<4x128xf32>
    %17 = arith.cmpf ogt, %12, %16 : vector<4x128xf32>
    %18 = arith.andi %15, %17 : vector<4x128xi1>
    %c0_6 = arith.constant 0 : index
    %c0_7 = arith.constant 0 : index
    %19 = vector.load %arg12[%c0_6, %c0_7] : memref<4x128xf32, #tpu.memory_space<vmem>>, vector<4x128xf32>
    %cst_8 = arith.constant 1.000000e+00 : f32
    %cst_9 = arith.constant 0.000000e+00 : f32
    %20 = vector.broadcast %cst_8 : f32 to vector<4x128xf32>
    %21 = vector.broadcast %cst_9 : f32 to vector<4x128xf32>
    %22 = arith.select %18, %20, %21 : vector<4x128xi1>, vector<4x128xf32>
    %23 = arith.addf %19, %22 : vector<4x128xf32>
    %c0_10 = arith.constant 0 : index
    %c0_11 = arith.constant 0 : index
    %24 = vector.load %arg12[%c0_10, %c0_11] : memref<4x128xf32, #tpu.memory_space<vmem>>, vector<4x128xf32>
    tpu.vector_store %arg12[%c0_10, %c0_11], %23 {strides = array<i32>} : memref<4x128xf32, #tpu.memory_space<vmem>>, vector<4x128xf32>,
    %c0_12 = arith.constant 0 : index
    %c0_13 = arith.constant 0 : index
    %25 = vector.load %arg13[%c0_12, %c0_13] : memref<4x128xf32, #tpu.memory_space<vmem>>, vector<4x128xf32>
    %cst_14 = arith.constant 1.000000e+00 : f32
    %cst_15 = arith.constant 0.000000e+00 : f32
    %26 = vector.broadcast %cst_14 : f32 to vector<4x128xf32>
    %27 = vector.broadcast %cst_15 : f32 to vector<4x128xf32>
    %28 = arith.select %15, %26, %27 : vector<4x128xi1>, vector<4x128xf32>
    %29 = arith.addf %25, %28 : vector<4x128xf32>
    %c0_16 = arith.constant 0 : index
    %c0_17 = arith.constant 0 : index
    %30 = vector.load %arg13[%c0_16, %c0_17] : memref<4x128xf32, #tpu.memory_space<vmem>>, vector<4x128xf32>
    tpu.vector_store %arg13[%c0_16, %c0_17], %29 {strides = array<i32>} : memref<4x128xf32, #tpu.memory_space<vmem>>, vector<4x128xf32>,
    %c0_18 = arith.constant 0 : index
    %c0_19 = arith.constant 0 : index
    %31 = vector.load %arg2[%c0_18, %c0_19] : memref<4x128xf32, #tpu.memory_space<vmem>>, vector<4x128xf32>
    %32 = arith.subf %31, %11 : vector<4x128xf32>
    %33 = arith.mulf %32, %32 : vector<4x128xf32>
    %c0_20 = arith.constant 0 : index
    %c0_21 = arith.constant 0 : index
    %34 = vector.load %arg10[%c0_20, %c0_21] : memref<4x128xf32, #tpu.memory_space<vmem>>, vector<4x128xf32>
    %cst_22 = arith.constant 0.000000e+00 : f32
    %35 = vector.broadcast %cst_22 : f32 to vector<4x128xf32>
    %36 = arith.select %18, %33, %35 : vector<4x128xi1>, vector<4x128xf32>
    %37 = arith.addf %34, %36 : vector<4x128xf32>
    %c0_23 = arith.constant 0 : index
    %c0_24 = arith.constant 0 : index
    %38 = vector.load %arg10[%c0_23, %c0_24] : memref<4x128xf32, #tpu.memory_space<vmem>>, vector<4x128xf32>
    tpu.vector_store %arg10[%c0_23, %c0_24], %37 {strides = array<i32>} : memref<4x128xf32, #tpu.memory_space<vmem>>, vector<4x128xf32>,
    %c0_25 = arith.constant 0 : index
    %c0_26 = arith.constant 0 : index
    %39 = vector.load %arg3[%c0_25, %c0_26] : memref<4x128xf32, #tpu.memory_space<vmem>>, vector<4x128xf32>
    %40 = arith.subf %39, %11 : vector<4x128xf32>
    %41 = arith.mulf %40, %40 : vector<4x128xf32>
    %c0_27 = arith.constant 0 : index
    %c0_28 = arith.constant 0 : index
    %42 = vector.load %arg11[%c0_27, %c0_28] : memref<4x128xf32, #tpu.memory_space<vmem>>, vector<4x128xf32>
    %cst_29 = arith.constant 0.000000e+00 : f32
    %43 = vector.broadcast %cst_29 : f32 to vector<4x128xf32>
    %44 = arith.select %18, %41, %43 : vector<4x128xi1>, vector<4x128xf32>
    %45 = arith.addf %42, %44 : vector<4x128xf32>
    %c0_30 = arith.constant 0 : index
    %c0_31 = arith.constant 0 : index
    %46 = vector.load %arg11[%c0_30, %c0_31] : memref<4x128xf32, #tpu.memory_space<vmem>>, vector<4x128xf32>
    tpu.vector_store %arg11[%c0_30, %c0_31], %45 {strides = array<i32>} : memref<4x128xf32, #tpu.memory_space<vmem>>, vector<4x128xf32>,
    %c0_i32_32 = arith.constant 0 : i32
    %47 = arith.cmpi eq, %arg1, %c0_i32_32 : i32
    %48 = arith.extui %47 : i1 to i32
    %c0_i32_33 = arith.constant 0 : i32
    %49 = arith.cmpi ne, %48, %c0_i32_33 : i32
    scf.if %49 {
      %c0_34 = arith.constant 0 : index
      %c0_35 = arith.constant 0 : index
      %50 = vector.load %arg10[%c0_34, %c0_35] : memref<4x128xf32, #tpu.memory_space<vmem>>, vector<4x128xf32>
      %cst_36 = arith.constant dense<0.000000e+00> : vector<128xf32>
      %51 = vector.multi_reduction <add>, %50, %cst_36 [0] : vector<4x128xf32> to vector<128xf32>
      %52 = vector.shape_cast %51 : vector<128xf32> to vector<1x1x128xf32>
      %c0_37 = arith.constant 0 : index
      %c0_38 = arith.constant 0 : index
      %c0_39 = arith.constant 0 : index
      %53 = vector.load %arg6[%c0_37, %c0_38, %c0_39] : memref<1x1x128xf32, #tpu.memory_space<vmem>>, vector<1x1x128xf32>
      tpu.vector_store %arg6[%c0_37, %c0_38, %c0_39], %52 {strides = array<i32>} : memref<1x1x128xf32, #tpu.memory_space<vmem>>, vector<1x1x128xf32>,
      %c0_40 = arith.constant 0 : index
      %c0_41 = arith.constant 0 : index
      %54 = vector.load %arg11[%c0_40, %c0_41] : memref<4x128xf32, #tpu.memory_space<vmem>>, vector<4x128xf32>
      %cst_42 = arith.constant dense<0.000000e+00> : vector<128xf32>
      %55 = vector.multi_reduction <add>, %54, %cst_42 [0] : vector<4x128xf32> to vector<128xf32>
      %56 = vector.shape_cast %55 : vector<128xf32> to vector<1x1x128xf32>
      %c0_43 = arith.constant 0 : index
      %c0_44 = arith.constant 0 : index
      %c0_45 = arith.constant 0 : index
      %57 = vector.load %arg7[%c0_43, %c0_44, %c0_45] : memref<1x1x128xf32, #tpu.memory_space<vmem>>, vector<1x1x128xf32>
      tpu.vector_store %arg7[%c0_43, %c0_44, %c0_45], %56 {strides = array<i32>} : memref<1x1x128xf32, #tpu.memory_space<vmem>>, vector<1x1x128xf32>,
      %c0_46 = arith.constant 0 : index
      %c0_47 = arith.constant 0 : index
      %58 = vector.load %arg12[%c0_46, %c0_47] : memref<4x128xf32, #tpu.memory_space<vmem>>, vector<4x128xf32>
      %cst_48 = arith.constant dense<0.000000e+00> : vector<128xf32>
      %59 = vector.multi_reduction <add>, %58, %cst_48 [0] : vector<4x128xf32> to vector<128xf32>
      %60 = vector.shape_cast %59 : vector<128xf32> to vector<1x1x128xf32>
      %c0_49 = arith.constant 0 : index
      %c0_50 = arith.constant 0 : index
      %c0_51 = arith.constant 0 : index
      %61 = vector.load %arg8[%c0_49, %c0_50, %c0_51] : memref<1x1x128xf32, #tpu.memory_space<vmem>>, vector<1x1x128xf32>
      tpu.vector_store %arg8[%c0_49, %c0_50, %c0_51], %60 {strides = array<i32>} : memref<1x1x128xf32, #tpu.memory_space<vmem>>, vector<1x1x128xf32>,
      %c0_52 = arith.constant 0 : index
      %c0_53 = arith.constant 0 : index
      %62 = vector.load %arg13[%c0_52, %c0_53] : memref<4x128xf32, #tpu.memory_space<vmem>>, vector<4x128xf32>
      %cst_54 = arith.constant dense<0.000000e+00> : vector<128xf32>
      %63 = vector.multi_reduction <add>, %62, %cst_54 [0] : vector<4x128xf32> to vector<128xf32>
      %64 = vector.shape_cast %63 : vector<128xf32> to vector<1x1x128xf32>
      %c0_55 = arith.constant 0 : index
      %c0_56 = arith.constant 0 : index
      %c0_57 = arith.constant 0 : index
      %65 = vector.load %arg9[%c0_55, %c0_56, %c0_57] : memref<1x1x128xf32, #tpu.memory_space<vmem>>, vector<1x1x128xf32>
      tpu.vector_store %arg9[%c0_55, %c0_56, %c0_57], %64 {strides = array<i32>} : memref<1x1x128xf32, #tpu.memory_space<vmem>>, vector<1x1x128xf32>,
    } else {
    }
    return
  }
  func.func @transform_0(%arg0: i32, %arg1: i32) -> (i32, i32) {
    %c1_i32 = arith.constant 1 : i32
    %0 = arith.muli %arg0, %c1_i32 : i32
    %1 = arith.addi %0, %arg1 : i32
    %c0_i32 = arith.constant 0 : i32
    %2 = arith.minsi %1, %c0_i32 : i32
    %c0_i32_0 = arith.constant 0 : i32
    %c0_i32_1 = arith.constant 0 : i32
    return %2, %c0_i32_0 : i32, i32
  }
  func.func @transform_1(%arg0: i32, %arg1: i32) -> (i32, i32) {
    %c1_i32 = arith.constant 1 : i32
    %0 = arith.muli %arg0, %c1_i32 : i32
    %1 = arith.addi %0, %arg1 : i32
    %c0_i32 = arith.constant 0 : i32
    %2 = arith.minsi %1, %c0_i32 : i32
    %c0_i32_0 = arith.constant 0 : i32
    %c0_i32_1 = arith.constant 0 : i32
    return %2, %c0_i32_0 : i32, i32
  }
  func.func @transform_2(%arg0: i32, %arg1: i32) -> (i32, i32) {
    %c1_i32 = arith.constant 1 : i32
    %0 = arith.muli %arg0, %c1_i32 : i32
    %1 = arith.addi %0, %arg1 : i32
    %c0_i32 = arith.constant 0 : i32
    %2 = arith.minsi %1, %c0_i32 : i32
    %c0_i32_0 = arith.constant 0 : i32
    %c0_i32_1 = arith.constant 0 : i32
    return %2, %c0_i32_0 : i32, i32
  }
  func.func @transform_3(%arg0: i32, %arg1: i32) -> (i32, i32) {
    %c1_i32 = arith.constant 1 : i32
    %0 = arith.muli %arg0, %c1_i32 : i32
    %1 = arith.addi %0, %arg1 : i32
    %c0_i32 = arith.constant 0 : i32
    %2 = arith.minsi %1, %c0_i32 : i32
    %c0_i32_0 = arith.constant 0 : i32
    %c0_i32_1 = arith.constant 0 : i32
    return %2, %c0_i32_0 : i32, i32
  }
  func.func @transform_4(%arg0: i32, %arg1: i32) -> (i32, i32, i32) {
    %c0_i32 = arith.constant 0 : i32
    %c0_i32_0 = arith.constant 0 : i32
    %c0_i32_1 = arith.constant 0 : i32
    return %arg0, %c0_i32, %c0_i32_0 : i32, i32, i32
  }
  func.func @transform_5(%arg0: i32, %arg1: i32) -> (i32, i32, i32) {
    %c0_i32 = arith.constant 0 : i32
    %c0_i32_0 = arith.constant 0 : i32
    %c0_i32_1 = arith.constant 0 : i32
    return %arg0, %c0_i32, %c0_i32_0 : i32, i32, i32
  }
  func.func @transform_6(%arg0: i32, %arg1: i32) -> (i32, i32, i32) {
    %c0_i32 = arith.constant 0 : i32
    %c0_i32_0 = arith.constant 0 : i32
    %c0_i32_1 = arith.constant 0 : i32
    return %arg0, %c0_i32, %c0_i32_0 : i32, i32, i32
  }
  func.func @transform_7(%arg0: i32, %arg1: i32) -> (i32, i32, i32) {
    %c0_i32 = arith.constant 0 : i32
    %c0_i32_0 = arith.constant 0 : i32
    %c0_i32_1 = arith.constant 0 : i32
    return %arg0, %c0_i32, %c0_i32_0 : i32, i32, i32
  }
}

</mosaic_0001>

<llo_original>
// kernel: _masked_sqerr_sums.1
$region0: #{_masked_sqerr_sums.1}
  #allocation0 [shape = 'u32[]', space=smem, size = 0x4, offset = 0x4, fixed_abs, tag = 'smem constant byte address 0x4 - core index']
  #allocation1 [shape = 'u32[144,128]{1,0:T(1,128)}', space=vmem, size = 0x12000, scoped, tag = 'internal scratch']
  #allocation2 [shape = 'f32[4,128]{1,0:T(4,128)}', space=vmem, size = 0x800, scoped, tag = 'scratch operand']
  #allocation3 [shape = 'f32[4,128]{1,0:T(4,128)}', space=vmem, size = 0x800, scoped, tag = 'scratch operand']
  #allocation4 [shape = 'f32[4,128]{1,0:T(4,128)}', space=vmem, size = 0x800, scoped, tag = 'scratch operand']
  #allocation5 [shape = 'f32[4,128]{1,0:T(4,128)}', space=vmem, size = 0x800, scoped, tag = 'scratch operand']
  %s0 = inlined_call_operand.vmem [shape: f32[4,128], index: 0, kind: input, shape index: {}]
  %s1 = inlined_call_operand.vmem [shape: f32[4,128], index: 1, kind: input, shape index: {}]
  %s2 = inlined_call_operand.hbm [shape: f32[4,128], index: 2, kind: input, shape index: {}]
  %s3 = inlined_call_operand.vmem [shape: f32[4,128], index: 3, kind: input, shape index: {}]
  %s4 = inlined_call_operand.vmem [shape: f32[1,1,128], index: 4, kind: output, shape index: {0}]
  %s5 = inlined_call_operand.vmem [shape: f32[1,1,128], index: 5, kind: output, shape index: {1}]
  %s6 = inlined_call_operand.vmem [shape: f32[1,1,128], index: 6, kind: output, shape index: {2}]
  %s7 = inlined_call_operand.vmem [shape: f32[1,1,128], index: 7, kind: output, shape index: {3}]
  %8 = xla_tuple %s4, %s5, %s6, %s7
  %s9 = sld [smem:[#allocation0]]
  $region62: #{_masked_sqerr_sums.1} parent=0
    _
  %s11 = ssub.s32 1, %s9
  %s12 = scalar_select 0, %s11, %s9
  $region1: #{_masked_sqerr_sums.1} parent=0
    #allocation6 [shape = 'u8[2048]{0}', space=vmem, size = 0x800, scoped, tag = 'input window, operand 2, single buffered']
    #allocation7 [shape = 's32[1]{0}', space=sflag, size = 0x4, scoped, tag = 'scoped memory for _masked_sqerr_sums.1']
    %13 = vsyncpa [#allocation7], 0
    // Predicated region
    $region2: #{_masked_sqerr_sums.1} parent=1 // pred_check
      _
    $region3: #{_masked_sqerr_sums.1} parent=1 // pred_check_branch
      %15 = sbr.rel (0) target = $region5
    $region4: #{_masked_sqerr_sums.1} parent=1 // pred_region
      %s16 = sadd.s32 0, 0
      %p17 = scmp.lt.s32.totalorder %s16, 0
      %s18 = scalar_select %p17, %s16, 0
      %p19 = scmp.lt.s32.totalorder %s18, 0
      %s20 = scalar_select %p19, %s18, 0
      %s21 = smul.addr %s20, 4
      %s22 = scalar_lea.vmem %s0, %s21
      %s23 = sadd.s32 0, 0
      %p24 = scmp.lt.s32.totalorder %s23, 0
      %s25 = scalar_select %p24, %s23, 0
    $region5: #{_masked_sqerr_sums.1} parent=1 // pred_fallthru
      _
    // Predicated region
    $region6: #{_masked_sqerr_sums.1} parent=1 // pred_check
      _
    $region7: #{_masked_sqerr_sums.1} parent=1 // pred_check_branch
      %27 = sbr.rel (0) target = $region9
    $region8: #{_masked_sqerr_sums.1} parent=1 // pred_region
      %s28 = sadd.s32 0, 0
      %p29 = scmp.lt.s32.totalorder %s28, 0
      %s30 = scalar_select %p29, %s28, 0
      %p31 = scmp.lt.s32.totalorder %s30, 0
      %s32 = scalar_select %p31, %s30, 0
      %s33 = smul.addr %s32, 4
      %s34 = scalar_lea.vmem %s1, %s33
      %s35 = sadd.s32 0, 0
      %p36 = scmp.lt.s32.totalorder %s35, 0
      %s37 = scalar_select %p36, %s35, 0
    $region9: #{_masked_sqerr_sums.1} parent=1 // pred_fallthru
      _
    // Predicated region
    $region10: #{_masked_sqerr_sums.1} parent=1 // pred_check
      _
    $region11: #{_masked_sqerr_sums.1} parent=1 // pred_check_branch
      %39 = sbr.rel (0) target = $region13
    $region12: #{_masked_sqerr_sums.1} parent=1 // pred_region
      %s40 = sadd.s32 0, 0
      %p41 = scmp.lt.s32.totalorder %s40, 0
      %s42 = scalar_select %p41, %s40, 0
      %s44 = ssub.s32 64, 64
      %45 = vsyncadd [#allocation7], %s44
      %s46 = smul.addr %s42, 64
      %s47 = scalar_lea.hbm %s2, %s46
      %s49 = sshll.u32 [#allocation6], 4
      %s50 = int_to_ptr.vmem [resolvable:$true] %s49
      %52 = dma.hbm_to_vmem [thread:$0]  %s47, 64, %s50, [#allocation7]
    $region13: #{_masked_sqerr_sums.1} parent=1 // pred_fallthru
      _
    // Predicated region
    $region14: #{_masked_sqerr_sums.1} parent=1 // pred_check
      _
    $region15: #{_masked_sqerr_sums.1} parent=1 // pred_check_branch
      %54 = sbr.rel (0) target = $region17
    $region16: #{_masked_sqerr_sums.1} parent=1 // pred_region
      %s55 = sadd.s32 0, 0
      %p56 = scmp.lt.s32.totalorder %s55, 0
      %s57 = scalar_select %p56, %s55, 0
      %p58 = scmp.lt.s32.totalorder %s57, 0
      %s59 = scalar_select %p58, %s57, 0
      %s60 = smul.addr %s59, 4
      %s61 = scalar_lea.vmem %s3, %s60
      %s62 = sadd.s32 0, 0
      %p63 = scmp.lt.s32.totalorder %s62, 0
      %s64 = scalar_select %p63, %s62, 0
    $region17: #{_masked_sqerr_sums.1} parent=1 // pred_fallthru
      _
    // Predicated region
    $region18: #{_masked_sqerr_sums.1} parent=1 // pred_check
      _
    $region19: #{_masked_sqerr_sums.1} parent=1 // pred_check_branch
      %66 = sbr.rel (0) target = $region21
    $region20: #{_masked_sqerr_sums.1} parent=1 // pred_region
      %67 = dma.done [#allocation7], 64
    $region21: #{_masked_sqerr_sums.1} parent=1 // pred_fallthru
      _
    %s68 = sadd.s32 0, 0
    %p69 = scmp.lt.s32.totalorder %s68, 0
    %s70 = scalar_select %p69, %s68, 0
    %p71 = scmp.lt.s32.totalorder %s70, 0
    %s72 = scalar_select %p71, %s70, 0
    %s73 = smul.addr %s72, 4
    %s74 = scalar_lea.vmem %s0, %s73
    %s75 = sadd.s32 0, 0
    %p76 = scmp.lt.s32.totalorder %s75, 0
    %s77 = scalar_select %p76, %s75, 0
    %p78 = scmp.lt.s32.totalorder %s77, 0
    %s79 = scalar_select %p78, %s77, 0
    %s80 = smul.addr %s79, 4
    %s81 = scalar_lea.vmem %s1, %s80
    %s82 = sadd.s32 0, 0
    %p83 = scmp.lt.s32.totalorder %s82, 0
    %s84 = scalar_select %p83, %s82, 0
    %p85 = scmp.lt.s32.totalorder %s84, 0
    %s86 = scalar_select %p85, %s84, 0
    %s87 = smul.addr %s86, 4
    %s88 = scalar_lea.vmem %s3, %s87
    %s89 = sadd.s32 0, 0
    %p90 = scmp.lt.s32.totalorder %s89, 0
    %s91 = scalar_select %p90, %s89, 0
    %p92 = scmp.lt.s32.totalorder %s91, 0
    %s93 = scalar_select %p92, %s91, 0
    %s94 = smul.addr %s93, 4
    %s95 = scalar_lea.vmem %s0, %s94
    %s96 = sadd.s32 0, 0
    %p97 = scmp.lt.s32.totalorder %s96, 0
    %s98 = scalar_select %p97, %s96, 0
    %s99 = sadd.s32 0, 0
    %p100 = scmp.lt.s32.totalorder %s99, 0
    %s101 = scalar_select %p100, %s99, 0
    %p102 = scmp.lt.s32.totalorder %s101, 0
    %s103 = scalar_select %p102, %s101, 0
    %s104 = smul.addr %s103, 4
    %s105 = scalar_lea.vmem %s1, %s104
    %s106 = sadd.s32 0, 0
    %p107 = scmp.lt.s32.totalorder %s106, 0
    %s108 = scalar_select %p107, %s106, 0
    %s109 = sadd.s32 0, 0
    %p110 = scmp.lt.s32.totalorder %s109, 0
    %s111 = scalar_select %p110, %s109, 0
    %s112 = sadd.s32 0, 0
    %p113 = scmp.lt.s32.totalorder %s112, 0
    %s114 = scalar_select %p113, %s112, 0
    %p115 = scmp.lt.s32.totalorder %s114, 0
    %s116 = scalar_select %p115, %s114, 0
    %s117 = smul.addr %s116, 4
    %s118 = scalar_lea.vmem %s3, %s117
    %s119 = sadd.s32 0, 0
    %p120 = scmp.lt.s32.totalorder %s119, 0
    %s121 = scalar_select %p120, %s119, 0
    %p122 = scmp.eq.s32.totalorder 0, 0
    // Predicated region
    $region22: #{_masked_sqerr_sums.1} parent=1 // pred_check
      %p123 = pneg %p122
    $region23: #{_masked_sqerr_sums.1} parent=1 // pred_check_branch
      %125 = sbr.rel (%p123) target = $region25
    $region24: #{_masked_sqerr_sums.1} parent=1 // pred_region
      %126 = vst [vmem:[#allocation2] sm:$0xf] 0.0
      %127 = vst [vmem:[#allocation3] sm:$0xf] 0.0
      %128 = vst [vmem:[#allocation4] sm:$0xf] 0.0
      %129 = vst [vmem:[#allocation5] sm:$0xf] 0.0
    $region25: #{_masked_sqerr_sums.1} parent=1 // pred_fallthru
      _
    %s130 = sadd.s32 0, 0
    %s131 = smul.u32 %s130, 4
    %v132 = vlaneseq
    %v133 = vshrl.u32 %v132, 7
    %v134 = vstv %s131
    %v135 = vadd.s32 %v134, %v133
    %vm136 = vcmp.lt.s32.totalorder %v135, 4
    %v137 = vld [vmem:[#allocation6] sm:$0xf]
    %v138 = vld [vmem:[%s118] sm:$0xf]
    %vm139 = vcmp.gt.f32.partialorder %v137, 0.0
    %vm140 = vmand %vm136, %vm139
    %vm141 = vcmp.gt.f32.partialorder %v138, 0.0
    %vm142 = vmand %vm140, %vm141
    %v143 = vld [vmem:[#allocation4] sm:$0xf]
    %v144 = vsel %vm142, 1.0, 0.0
    %v145 = vadd.f32 %v143, %v144
    %146 = vst [vmem:[#allocation4] sm:$0xf] %v145
    %v147 = vld [vmem:[#allocation5] sm:$0xf]
    %v148 = vsel %vm140, 1.0, 0.0
    %v149 = vadd.f32 %v147, %v148
    %150 = vst [vmem:[#allocation5] sm:$0xf] %v149
    %v151 = vld [vmem:[%s95] sm:$0xf]
    %v152 = vsub.f32 %v151, %v137
    %v153 = vmul.f32 %v152, %v152
    %v154 = vld [vmem:[#allocation2] sm:$0xf]
    %v155 = vsel %vm142, %v153, 0.0
    %v156 = vadd.f32 %v154, %v155
    %157 = vst [vmem:[#allocation2] sm:$0xf] %v156
    %v158 = vld [vmem:[%s105] sm:$0xf]
    %v159 = vsub.f32 %v158, %v137
    %v160 = vmul.f32 %v159, %v159
    %v161 = vld [vmem:[#allocation3] sm:$0xf]
    %v162 = vsel %vm142, %v160, 0.0
    %v163 = vadd.f32 %v161, %v162
    %164 = vst [vmem:[#allocation3] sm:$0xf] %v163
    // Predicated region
    $region26: #{_masked_sqerr_sums.1} parent=1 // pred_check
      %p165 = pneg %p122
    $region27: #{_masked_sqerr_sums.1} parent=1 // pred_check_branch
      %167 = sbr.rel (%p165) target = $region29
    $region28: #{_masked_sqerr_sums.1} parent=1 // pred_region
      %v168 = vld [vmem:[#allocation2] sm:$0xf]
      %vm169 = vcmask 1043456
      %v170 = vsel %vm169, %v168, 0.0
      %v171 = vrot.slane %v170, 4
      %v172 = vadd.f32 %v170, %v171
      %v173 = vrot.slane %v172, 2
      %v174 = vadd.f32 %v172, %v173
      %v175 = vrot.slane %v174, 1
      %v176 = vadd.f32 %v174, %v175
      %177 = vst [vmem:[%s4] sm:$0x1] %v176
      %v178 = vld [vmem:[#allocation3] sm:$0xf]
      %v179 = vsel %vm169, %v178, 0.0
      %v180 = vrot.slane %v179, 4
      %v181 = vadd.f32 %v179, %v180
      %v182 = vrot.slane %v181, 2
      %v183 = vadd.f32 %v181, %v182
      %v184 = vrot.slane %v183, 1
      %v185 = vadd.f32 %v183, %v184
      %186 = vst [vmem:[%s5] sm:$0x1] %v185
      %v187 = vld [vmem:[#allocation4] sm:$0xf]
      %v188 = vsel %vm169, %v187, 0.0
      %v189 = vrot.slane %v188, 4
      %v190 = vadd.f32 %v188, %v189
      %v191 = vrot.slane %v190, 2
      %v192 = vadd.f32 %v190, %v191
      %v193 = vrot.slane %v192, 1
      %v194 = vadd.f32 %v192, %v193
      %195 = vst [vmem:[%s6] sm:$0x1] %v194
      %v196 = vld [vmem:[#allocation5] sm:$0xf]
      %v197 = vsel %vm169, %v196, 0.0
      %v198 = vrot.slane %v197, 4
      %v199 = vadd.f32 %v197, %v198
      %v200 = vrot.slane %v199, 2
      %v201 = vadd.f32 %v199, %v200
      %v202 = vrot.slane %v201, 1
      %v203 = vadd.f32 %v201, %v202
      %204 = vst [vmem:[%s7] sm:$0x1] %v203
    $region29: #{_masked_sqerr_sums.1} parent=1 // pred_fallthru
      _
    // Predicated region
    $region30: #{_masked_sqerr_sums.1} parent=1 // pred_check
      _
    $region31: #{_masked_sqerr_sums.1} parent=1 // pred_check_branch
      %206 = sbr.rel (0) target = $region33
    $region32: #{_masked_sqerr_sums.1} parent=1 // pred_region
      _
    $region33: #{_masked_sqerr_sums.1} parent=1 // pred_fallthru
      _
    // Predicated region
    $region34: #{_masked_sqerr_sums.1} parent=1 // pred_check
      _
    $region35: #{_masked_sqerr_sums.1} parent=1 // pred_check_branch
      %208 = sbr.rel (0) target = $region37
    $region36: #{_masked_sqerr_sums.1} parent=1 // pred_region
      _
    $region37: #{_masked_sqerr_sums.1} parent=1 // pred_fallthru
      _
    // Predicated region
    $region38: #{_masked_sqerr_sums.1} parent=1 // pred_check
      _
    $region39: #{_masked_sqerr_sums.1} parent=1 // pred_check_branch
      %210 = sbr.rel (0) target = $region41
    $region40: #{_masked_sqerr_sums.1} parent=1 // pred_region
      _
    $region41: #{_masked_sqerr_sums.1} parent=1 // pred_fallthru
      _
    // Predicated region
    $region42: #{_masked_sqerr_sums.1} parent=1 // pred_check
      _
    $region43: #{_masked_sqerr_sums.1} parent=1 // pred_check_branch
      %212 = sbr.rel (0) target = $region45
    $region44: #{_masked_sqerr_sums.1} parent=1 // pred_region
      _
    $region45: #{_masked_sqerr_sums.1} parent=1 // pred_fallthru
      _
    // Predicated region
    $region46: #{_masked_sqerr_sums.1} parent=1 // pred_check
      _
    $region47: #{_masked_sqerr_sums.1} parent=1 // pred_check_branch
      %214 = sbr.rel (0) target = $region49
    $region48: #{_masked_sqerr_sums.1} parent=1 // pred_region
      _
    $region49: #{_masked_sqerr_sums.1} parent=1 // pred_fallthru
      _
    // Predicated region
    $region50: #{_masked_sqerr_sums.1} parent=1 // pred_check
      _
    $region51: #{_masked_sqerr_sums.1} parent=1 // pred_check_branch
      %216 = sbr.rel (0) target = $region53
    $region52: #{_masked_sqerr_sums.1} parent=1 // pred_region
      _
    $region53: #{_masked_sqerr_sums.1} parent=1 // pred_fallthru
      _
    // Predicated region
    $region54: #{_masked_sqerr_sums.1} parent=1 // pred_check
      _
    $region55: #{_masked_sqerr_sums.1} parent=1 // pred_check_branch
      %218 = sbr.rel (0) target = $region57
    $region56: #{_masked_sqerr_sums.1} parent=1 // pred_region
      _
    $region57: #{_masked_sqerr_sums.1} parent=1 // pred_fallthru
      _
    // Predicated region
    $region58: #{_masked_sqerr_sums.1} parent=1 // pred_check
      _
    $region59: #{_masked_sqerr_sums.1} parent=1 // pred_check_branch
      %220 = sbr.rel (0) target = $region61
    $region60: #{_masked_sqerr_sums.1} parent=1 // pred_region
      _
    $region61: #{_masked_sqerr_sums.1} parent=1 // pred_fallthru
      _
    %221 = vsyncpa [#allocation7], 1

</llo_original>
